<compile_context>
chip_gen: v6e
topology: v6e:2x2x1
jax: 0.10.0
libtpu: 0.0.40
codegen_flags: <defaults>
</compile_context>

<pallas_src>
import functools
import math

import jax
import jax.numpy as jnp
from jax.experimental import pallas as pl
from jax.experimental.pallas import tpu as pltpu


_LN_EPS = 1e-6            # nn.LayerNorm(d_model, eps=1e-06) in the reference
_ROW_TILE = 512           # rows per block for the dense kernels (fits v7x VMEM)
_Q_TILE_TARGET = 256      # query rows per flash-attention block
_KV_TILE_TARGET = 512     # key/value rows per flash-attention block


def _row_tile(m, target=_ROW_TILE):
    return m if m <= target else target


def _divisor_tile(n, target):
    """Largest multiple-of-8 tile <= target that divides n (or n itself)."""
    if n <= target:
        return n
    t = (target // 8) * 8
    while t >= 8:
        if n % t == 0:
            return t
        t -= 8
    return n


# ----------------------------- Pallas kernels -----------------------------

def _matmul_kernel(x_ref, w_ref, o_ref):
    # o = x @ w, bf16 operands on the MXU, f32 accumulation. No bias (the
    # PyTorch q/k/v/fc projections are bias-free).
    y = jnp.dot(x_ref[...].astype(jnp.bfloat16), w_ref[...],
                preferred_element_type=jnp.float32)
    o_ref[...] = y.astype(o_ref.dtype)


def _proj_res_ln_kernel(x_ref, w_ref, res_ref, g_ref, b_ref, o_ref, *, eps):
    # o = LayerNorm(x @ w + residual)   (fused MHA epilogue)
    y = jnp.dot(x_ref[...].astype(jnp.bfloat16), w_ref[...],
                preferred_element_type=jnp.float32)
    y = y + res_ref[...].astype(jnp.float32)
    mean = jnp.mean(y, axis=-1, keepdims=True)
    var = jnp.mean(jnp.square(y - mean), axis=-1, keepdims=True)
    xn = (y - mean) * jax.lax.rsqrt(var + eps)
    o_ref[...] = (xn * g_ref[...] + b_ref[...]).astype(o_ref.dtype)


def _ffn_res_ln_kernel(x_ref, w1_ref, b1_ref, w2_ref, b2_ref, g_ref, b_ref,
                       o_ref, *, eps):
    # o = LayerNorm(relu(x @ w1 + b1) @ w2 + b2 + x)   (whole FFN sublayer)
    x = x_ref[...]
    h = jnp.dot(x.astype(jnp.bfloat16), w1_ref[...],
                preferred_element_type=jnp.float32)
    h = jnp.maximum(h + b1_ref[...], 0.0)
    y = jnp.dot(h.astype(jnp.bfloat16), w2_ref[...],
                preferred_element_type=jnp.float32)
    y = y + b2_ref[...] + x.astype(jnp.float32)
    mean = jnp.mean(y, axis=-1, keepdims=True)
    var = jnp.mean(jnp.square(y - mean), axis=-1, keepdims=True)
    xn = (y - mean) * jax.lax.rsqrt(var + eps)
    o_ref[...] = (xn * g_ref[...] + b_ref[...]).astype(o_ref.dtype)


def _flash_attention_kernel(q_ref, k_ref, v_ref, o_ref, m_sc, l_sc, acc_sc):
    # One (batch, head, q_tile) accumulator, iterated over kv tiles (last grid
    # axis, 'arbitrary'). 1/temperature is already folded into the Q weights.
    kv_idx = pl.program_id(3)

    @pl.when(kv_idx == 0)
    def _():
        m_sc[...] = jnp.full(m_sc.shape, -jnp.inf, jnp.float32)
        l_sc[...] = jnp.zeros(l_sc.shape, jnp.float32)
        acc_sc[...] = jnp.zeros(acc_sc.shape, jnp.float32)

    q = q_ref[0].astype(jnp.bfloat16)          # (tq, d_k)
    k = k_ref[0].astype(jnp.bfloat16)          # (tk, d_k)
    v = v_ref[0].astype(jnp.bfloat16)          # (tk, d_v)

    # s = q @ k^T without an explicit transpose (contract on dim 1 of both).
    s = jax.lax.dot_general(q, k, (((1,), (1,)), ((), ())),
                            preferred_element_type=jnp.float32)   # (tq, tk)

    m_prev = m_sc[...]
    m_new = jnp.maximum(m_prev, jnp.max(s, axis=-1, keepdims=True))
    alpha = jnp.exp(m_prev - m_new)
    p = jnp.exp(s - m_new)
    l_sc[...] = alpha * l_sc[...] + jnp.sum(p, axis=-1, keepdims=True)
    acc_sc[...] = alpha * acc_sc[...] + jnp.dot(
        p.astype(jnp.bfloat16), v, preferred_element_type=jnp.float32)
    m_sc[...] = m_new

    @pl.when(kv_idx == pl.num_programs(3) - 1)
    def _():
        o_ref[0] = (acc_sc[...] *
                    pl.reciprocal(l_sc[...], approx=True)).astype(o_ref.dtype)


# ----------------------------- wrappers -----------------------------

def matmul_rows(x, w):
    """x: (M, K) f32, w: (K, N) bf16 -> (M, N) f32, row-tiled over M."""
    M, K = x.shape
    N = w.shape[1]
    TM = _row_tile(M)
    return pl.pallas_call(
        _matmul_kernel,
        out_shape=jax.ShapeDtypeStruct((M, N), jnp.float32),
        grid=(pl.cdiv(M, TM),),
        in_specs=[pl.BlockSpec((TM, K), lambda i: (i, 0)),
                  pl.BlockSpec((K, N), lambda i: (0, 0))],
        out_specs=pl.BlockSpec((TM, N), lambda i: (i, 0)),
        compiler_params=pltpu.CompilerParams(
            dimension_semantics=("parallel",)),
    )(x, w)


def proj_residual_layernorm(x, w, residual, gamma, beta, eps=_LN_EPS):
    """LayerNorm(x @ w + residual), row-tiled over M."""
    M, K = x.shape
    D = w.shape[1]
    TM = _row_tile(M)
    return pl.pallas_call(
        functools.partial(_proj_res_ln_kernel, eps=eps),
        out_shape=jax.ShapeDtypeStruct((M, D), jnp.float32),
        grid=(pl.cdiv(M, TM),),
        in_specs=[pl.BlockSpec((TM, K), lambda i: (i, 0)),
                  pl.BlockSpec((K, D), lambda i: (0, 0)),
                  pl.BlockSpec((TM, D), lambda i: (i, 0)),
                  pl.BlockSpec((1, D), lambda i: (0, 0)),
                  pl.BlockSpec((1, D), lambda i: (0, 0))],
        out_specs=pl.BlockSpec((TM, D), lambda i: (i, 0)),
        compiler_params=pltpu.CompilerParams(
            dimension_semantics=("parallel",)),
    )(x, w, residual, gamma.reshape(1, D), beta.reshape(1, D))


def ffn_residual_layernorm(x, w1, b1, w2, b2, gamma, beta, eps=_LN_EPS):
    """LayerNorm(relu(x@w1+b1)@w2 + b2 + x), row-tiled over M."""
    M, D = x.shape
    H = w1.shape[1]
    TM = _row_tile(M)
    return pl.pallas_call(
        functools.partial(_ffn_res_ln_kernel, eps=eps),
        out_shape=jax.ShapeDtypeStruct((M, D), jnp.float32),
        grid=(pl.cdiv(M, TM),),
        in_specs=[pl.BlockSpec((TM, D), lambda i: (i, 0)),
                  pl.BlockSpec((D, H), lambda i: (0, 0)),
                  pl.BlockSpec((1, H), lambda i: (0, 0)),
                  pl.BlockSpec((H, D), lambda i: (0, 0)),
                  pl.BlockSpec((1, D), lambda i: (0, 0)),
                  pl.BlockSpec((1, D), lambda i: (0, 0)),
                  pl.BlockSpec((1, D), lambda i: (0, 0))],
        out_specs=pl.BlockSpec((TM, D), lambda i: (i, 0)),
        compiler_params=pltpu.CompilerParams(
            dimension_semantics=("parallel",)),
    )(x, w1, b1.reshape(1, H), w2, b2.reshape(1, D),
      gamma.reshape(1, D), beta.reshape(1, D))


def flash_attention(q_arr, k_arr, v_arr, q_off, k_off, v_off,
                    *, n_head, d_k, d_v, Lq, Lk):
    """Flash-style attention over head-concatenated (B, L, H*dim) arrays.

    q_off/k_off/v_off are *block* offsets (in d_k / d_v lane-tile units) into
    the last dim of q_arr/k_arr/v_arr, so fused QKV / KV projection outputs
    can be consumed directly without slicing or transposing.
    """
    B = q_arr.shape[0]
    tq = _divisor_tile(Lq, _Q_TILE_TARGET)
    tk = _divisor_tile(Lk, _KV_TILE_TARGET)
    grid = (B, n_head, Lq // tq, Lk // tk)
    return pl.pallas_call(
        _flash_attention_kernel,
        out_shape=jax.ShapeDtypeStruct((B, Lq, n_head * d_v), jnp.float32),
        grid=grid,
        in_specs=[
            pl.BlockSpec((1, tq, d_k), lambda b, h, qi, ki: (b, qi, q_off + h)),
            pl.BlockSpec((1, tk, d_k), lambda b, h, qi, ki: (b, ki, k_off + h)),
            pl.BlockSpec((1, tk, d_v), lambda b, h, qi, ki: (b, ki, v_off + h)),
        ],
        out_specs=pl.BlockSpec((1, tq, d_v), lambda b, h, qi, ki: (b, qi, h)),
        scratch_shapes=[pltpu.VMEM((tq, 1), jnp.float32),
                        pltpu.VMEM((tq, 1), jnp.float32),
                        pltpu.VMEM((tq, d_v), jnp.float32)],
        compiler_params=pltpu.CompilerParams(
            dimension_semantics=("parallel", "parallel", "parallel",
                                 "arbitrary")),
    )(q_arr, k_arr, v_arr)


# ----------------------------- module forward -----------------------------

def cross_attention_forward(params, q_in, k_in, v_in):
    """CrossAttention.forward (eval mode). Returns enc_output (B, Lq, d_model)."""
    p = params
    n_head, d_k, d_v = p["n_head"], p["d_k"], p["d_v"]
    B, Lq, d_model = q_in.shape
    Lk = k_in.shape[1]
    assert v_in.shape[1] == Lk
    nh_dk = n_head * d_k
    w_qkv = p["w_qkv"]

    if (q_in is k_in) and (k_in is v_in):
        # Self-attention: one fused QKV matmul; sections/heads picked by index_map.
        qkv = matmul_rows(q_in.reshape(B * Lq, d_model), w_qkv)
        qkv = qkv.reshape(B, Lq, -1)
        q_arr = k_arr = v_arr = qkv
        q_off, k_off, v_off = 0, n_head, (2 * nh_dk) // d_v
    elif k_in is v_in:
        # Cross-attention with a shared K/V source: fused KV matmul.
        q_arr = matmul_rows(q_in.reshape(B * Lq, d_model),
                            w_qkv[:, :nh_dk]).reshape(B, Lq, nh_dk)
        kv = matmul_rows(k_in.reshape(B * Lk, d_model),
                         w_qkv[:, nh_dk:]).reshape(B, Lk, -1)
        k_arr = v_arr = kv
        q_off, k_off, v_off = 0, 0, nh_dk // d_v
    else:
        q_arr = matmul_rows(q_in.reshape(B * Lq, d_model),
                            w_qkv[:, :nh_dk]).reshape(B, Lq, nh_dk)
        k_arr = matmul_rows(k_in.reshape(B * Lk, d_model),
                            w_qkv[:, nh_dk:2 * nh_dk]).reshape(B, Lk, nh_dk)
        v_arr = matmul_rows(v_in.reshape(B * Lk, d_model),
                            w_qkv[:, 2 * nh_dk:]).reshape(B, Lk, n_head * d_v)
        q_off = k_off = v_off = 0

    attn_out = flash_attention(q_arr, k_arr, v_arr, q_off, k_off, v_off,
                               n_head=n_head, d_k=d_k, d_v=d_v, Lq=Lq, Lk=Lk)

    # fc projection + (dropout==identity) + residual + LayerNorm, fused.
    mha_out = proj_residual_layernorm(
        attn_out.reshape(B * Lq, n_head * d_v), p["w_fc"],
        q_in.reshape(B * Lq, d_model), p["ln1_g"], p["ln1_b"])

    # Position-wise FFN + residual + LayerNorm, fused.
    out = ffn_residual_layernorm(mha_out, p["w1"], p["b1"], p["w2"], p["b2"],
                                 p["ln2_g"], p["ln2_b"])
    return out.reshape(B, Lq, d_model)


# ----------------------------- parameters -----------------------------

def _init_w(key, d_in, d_out):
    return jax.random.normal(key, (d_in, d_out), jnp.float32) / math.sqrt(d_in)


def init_cross_attention(key, d_model, d_inner, n_head, d_k, d_v):
    assert d_k % 128 == 0 and d_v % 128 == 0, "head dims must be lane-aligned"
    assert (n_head * d_k) % d_v == 0
    ks = jax.random.split(key, 8)
    temperature = float(d_k) ** 0.5
    # Fold 1/temperature into the Q projection weights (mathematically equal).
    w_q = _init_w(ks[0], d_model, n_head * d_k) / temperature
    w_k = _init_w(ks[1], d_model, n_head * d_k)
    w_v = _init_w(ks[2], d_model, n_head * d_v)
    return {
        "n_head": n_head, "d_k": d_k, "d_v": d_v,
        "w_qkv": jnp.concatenate([w_q, w_k, w_v], axis=1).astype(jnp.bfloat16),
        "w_fc": _init_w(ks[3], n_head * d_v, d_model).astype(jnp.bfloat16),
        "ln1_g": jnp.ones((d_model,), jnp.float32),
        "ln1_b": jnp.zeros((d_model,), jnp.float32),
        "w1": _init_w(ks[4], d_model, d_inner).astype(jnp.bfloat16),
        "b1": 0.01 * jax.random.normal(ks[5], (d_inner,), jnp.float32),
        "w2": _init_w(ks[6], d_inner, d_model).astype(jnp.bfloat16),
        "b2": 0.01 * jax.random.normal(ks[7], (d_model,), jnp.float32),
        "ln2_g": jnp.ones((d_model,), jnp.float32),
        "ln2_b": jnp.zeros((d_model,), jnp.float32),
    }


# ----------------------------- pure-JAX reference -----------------------------

def _reference_forward(params, q_in, k_in, v_in):
    p = params
    n_head, d_k, d_v = p["n_head"], p["d_k"], p["d_v"]
    B, Lq, d_model = q_in.shape
    Lk = k_in.shape[1]
    nh_dk = n_head * d_k
    w = p["w_qkv"].astype(jnp.float32)

    q = (q_in @ w[:, :nh_dk]).reshape(B, Lq, n_head, d_k).transpose(0, 2, 1, 3)
    k = (k_in @ w[:, nh_dk:2 * nh_dk]).reshape(B, Lk, n_head, d_k).transpose(0, 2, 1, 3)
    v = (v_in @ w[:, 2 * nh_dk:]).reshape(B, Lk, n_head, d_v).transpose(0, 2, 1, 3)
    s = jnp.einsum("bhqd,bhkd->bhqk", q, k)          # 1/T folded into W_q
    attn = jax.nn.softmax(s, axis=-1)
    o = jnp.einsum("bhqk,bhkd->bhqd", attn, v)
    o = o.transpose(0, 2, 1, 3).reshape(B, Lq, n_head * d_v)
    o = o @ p["w_fc"].astype(jnp.float32)

    def ln(x, g, b):
        mu = x.mean(-1, keepdims=True)
        var = ((x - mu) ** 2).mean(-1, keepdims=True)
        return (x - mu) * jax.lax.rsqrt(var + _LN_EPS) * g + b

    x1 = ln(o + q_in, p["ln1_g"], p["ln1_b"])
    h = jnp.maximum(x1 @ p["w1"].astype(jnp.float32) + p["b1"], 0.0)
    y = h @ p["w2"].astype(jnp.float32) + p["b2"]
    return ln(y + x1, p["ln2_g"], p["ln2_b"])


# ------------------------------------ main ------------------------------------

if __name__ == "__main__":
    B, Lq, Lk = 2, 8, 16
    d_model, d_inner, n_head, d_k, d_v = 256, 512, 4, 128, 128

    root = jax.random.PRNGKey(0)
    kp, kq, kk = jax.random.split(root, 3)
    params = init_cross_attention(kp, d_model, d_inner, n_head, d_k, d_v)
    q_in = jax.random.normal(kq, (B, Lq, d_model), jnp.float32)
    kv_in = jax.random.normal(kk, (B, Lk, d_model), jnp.float32)

    # Cross-attention call (k and v share the same source -> fused KV matmul).
    out = jax.block_until_ready(cross_attention_forward(params, q_in, kv_in, kv_in))
    assert out.shape == (B, Lq, d_model), out.shape
    assert bool(jnp.all(jnp.isfinite(out)))
    ref = _reference_forward(params, q_in, kv_in, kv_in)
    # Loose tolerance: kernels use bf16 MXU operands + approx reciprocal.
    assert bool(jnp.allclose(out, ref, rtol=0.2, atol=0.2))

    # Also exercise the fully fused QKV (self-attention) path.
    out_self = jax.block_until_ready(
        cross_attention_forward(params, kv_in, kv_in, kv_in))
    assert out_self.shape == (B, Lk, d_model), out_self.shape
    assert bool(jnp.all(jnp.isfinite(out_self)))
    ref_self = _reference_forward(params, kv_in, kv_in, kv_in)
    assert bool(jnp.allclose(out_self, ref_self, rtol=0.2, atol=0.2))

    print("KERNEL_OK")
</pallas_src>

<mosaic_0001>
module attributes {stable_mosaic.version = 11 : i64} {
  func.func @_matmul_kernel(%arg0: i32, %arg1: memref<16x256xf32, #tpu.memory_space<vmem>>, %arg2: memref<256x512xbf16, #tpu.memory_space<vmem>>, %arg3: memref<16x512xf32, #tpu.memory_space<vmem>>) attributes {dimension_semantics = [#tpu.dimension_semantics<parallel>], iteration_bounds = array<i64: 1>, scalar_prefetch = 0 : i64, scratch_operands = 0 : i64, tpu.core_type = #tpu.core_type<tc>, window_params = [{transform_indices = @transform_0, window_bounds = array<i64: 16, 256>}, {pipeline_mode = #tpu.pipeline_mode<synchronous>, transform_indices = @transform_1, window_bounds = array<i64: 256, 512>}, {transform_indices = @transform_2, window_bounds = array<i64: 16, 512>}]} {
    %c0 = arith.constant 0 : index
    %c0_0 = arith.constant 0 : index
    %0 = vector.load %arg1[%c0, %c0_0] : memref<16x256xf32, #tpu.memory_space<vmem>>, vector<16x256xf32>
    %1 = arith.truncf %0 : vector<16x256xf32> to vector<16x256xbf16>
    %c0_1 = arith.constant 0 : index
    %c0_2 = arith.constant 0 : index
    %2 = vector.load %arg2[%c0_1, %c0_2] : memref<256x512xbf16, #tpu.memory_space<vmem>>, vector<256x512xbf16>
    %cst = arith.constant dense<0.000000e+00> : vector<16x512xf32>
    %3 = tpu.matmul %1, %2, %cst {dimension_numbers = #tpu.dot_dimension_numbers<[1], [0], [0], [1], [0, 0, 1, 1], [], []>} : vector<16x256xbf16>, vector<256x512xbf16>, vector<16x512xf32> -> vector<16x512xf32>
    %c0_3 = arith.constant 0 : index
    %c0_4 = arith.constant 0 : index
    %4 = vector.load %arg3[%c0_3, %c0_4] : memref<16x512xf32, #tpu.memory_space<vmem>>, vector<16x512xf32>
    tpu.vector_store %arg3[%c0_3, %c0_4], %3 {strides = array<i32>} : memref<16x512xf32, #tpu.memory_space<vmem>>, vector<16x512xf32>,
    return
  }
  func.func @transform_0(%arg0: i32) -> (i32, i32) {
    %c0_i32 = arith.constant 0 : i32
    %c0_i32_0 = arith.constant 0 : i32
    return %arg0, %c0_i32 : i32, i32
  }
  func.func @transform_1(%arg0: i32) -> (i32, i32) {
    %c0_i32 = arith.constant 0 : i32
    %c0_i32_0 = arith.constant 0 : i32
    %c0_i32_1 = arith.constant 0 : i32
    return %c0_i32, %c0_i32_0 : i32, i32
  }
  func.func @transform_2(%arg0: i32) -> (i32, i32) {
    %c0_i32 = arith.constant 0 : i32
    %c0_i32_0 = arith.constant 0 : i32
    return %arg0, %c0_i32 : i32, i32
  }
}

</mosaic_0001>

<llo_original>
// kernel: tpu_custom_call.1
$region0: #{tpu_custom_call.1}
  #allocation0 [shape = 'u32[]', space=smem, size = 0x4, offset = 0x4, fixed_abs, tag = 'smem constant byte address 0x4 - core index']
  #allocation1 [shape = 'u32[144,128]{1,0:T(1,128)}', space=vmem, size = 0x12000, scoped, tag = 'internal scratch']
  %s0 = inlined_call_operand.hbm [shape: f32[16,256], index: 0, kind: input, shape index: {}]
  %s1 = inlined_call_operand.hbm [shape: bf16[256,512], index: 1, kind: input, shape index: {}]
  %s2 = inlined_call_operand.hbm [shape: f32[16,512], index: 2, kind: output, shape index: {}]
  %s3 = sld [smem:[#allocation0]]
  $region26: #{tpu_custom_call.1} parent=0
    _
  %s5 = ssub.s32 1, %s3
  %s6 = scalar_select 0, %s5, %s3
  $region1: #{tpu_custom_call.1} parent=0
    #allocation2 [shape = 'u8[16384]{0}', space=vmem, size = 0x4000, scoped, tag = 'input window, operand 0, single buffered']
    #allocation3 [shape = 's32[1]{0}', space=sflag, size = 0x4, scoped, tag = 'scoped memory for tpu_custom_call.1']
    #allocation4 [shape = 's32[1]{0}', space=sflag, size = 0x4, scoped, tag = 'scoped memory for tpu_custom_call.1']
    #allocation5 [shape = 'u8[262144]{0}', space=vmem, size = 0x40000, scoped, tag = 'input window, operand 1, single buffered']
    #allocation6 [shape = 's32[1]{0}', space=sflag, size = 0x4, scoped, tag = 'scoped memory for tpu_custom_call.1']
    #allocation7 [shape = 'u8[32768]{0}', space=vmem, size = 0x8000, scoped, tag = 'output window, operand 0, single buffered']
    %7 = vsyncpa [#allocation3], 0
    %8 = vsyncpa [#allocation6], 0
    %9 = vsyncpa [#allocation4], 0
    // Predicated region
    $region2: #{tpu_custom_call.1} parent=1 // pred_check
      _
    $region3: #{tpu_custom_call.1} parent=1 // pred_check_branch
      %11 = sbr.rel (0) target = $region5
    $region4: #{tpu_custom_call.1} parent=1 // pred_region
      %s13 = ssub.s32 512, 512
      %14 = vsyncadd [#allocation3], %s13
      %s15 = sshll.u32 [#allocation2], 4
      %s16 = int_to_ptr.vmem [resolvable:$true] %s15
      %21 = dma.hbm_to_vmem [thread:$0]  %s0, 512, %s16, [#allocation3], 256, 256, 16
    $region5: #{tpu_custom_call.1} parent=1 // pred_fallthru
      _
    // Predicated region
    $region6: #{tpu_custom_call.1} parent=1 // pred_check
      _
    $region7: #{tpu_custom_call.1} parent=1 // pred_check_branch
      %23 = sbr.rel (0) target = $region9
    $region8: #{tpu_custom_call.1} parent=1 // pred_region
      %s25 = ssub.s32 8192, 8192
      %26 = vsyncadd [#allocation6], %s25
      %s27 = sshll.u32 [#allocation5], 4
      %s28 = int_to_ptr.vmem [resolvable:$true] %s27
      %33 = dma.hbm_to_vmem [thread:$0]  %s1, 8192, %s28, [#allocation6], 256, 256, 16
    $region9: #{tpu_custom_call.1} parent=1 // pred_fallthru
      _
    // Predicated region
    $region10: #{tpu_custom_call.1} parent=1 // pred_check
      _
    $region11: #{tpu_custom_call.1} parent=1 // pred_check_branch
      %35 = sbr.rel (0) target = $region13
    $region12: #{tpu_custom_call.1} parent=1 // pred_region
      %36 = dma.done [#allocation3], 512
    $region13: #{tpu_custom_call.1} parent=1 // pred_fallthru
      _
    // Predicated region
    $region14: #{tpu_custom_call.1} parent=1 // pred_check
      _
    $region15: #{tpu_custom_call.1} parent=1 // pred_check_branch
      %38 = sbr.rel (0) target = $region17
    $region16: #{tpu_custom_call.1} parent=1 // pred_region
      %39 = dma.done [#allocation6], 8192
    $region17: #{tpu_custom_call.1} parent=1 // pred_fallthru
      _
    %v40 = vld [vmem:[#allocation2] sm:$0xff]
    %v41 = vld [vmem:[#allocation2 + $0x8] sm:$0xff]
    %v42 = vld [vmem:[#allocation2 + $0x10] sm:$0xff]
    %v43 = vld [vmem:[#allocation2 + $0x18] sm:$0xff]
    %v44 = vpack.c.bf16 %v42, %v40
    %v45 = vpack.c.bf16 %v43, %v41
    %v46 = vld [vmem:[#allocation5] sm:$0xff]
    %v47 = vld [vmem:[#allocation5 + $0x8] sm:$0xff]
    %v48 = vld [vmem:[#allocation5 + $0x10] sm:$0xff]
    %v49 = vld [vmem:[#allocation5 + $0x18] sm:$0xff]
    %v50 = vld [vmem:[#allocation5 + $0x20] sm:$0xff]
    %v51 = vld [vmem:[#allocation5 + $0x28] sm:$0xff]
    %v52 = vld [vmem:[#allocation5 + $0x30] sm:$0xff]
    %v53 = vld [vmem:[#allocation5 + $0x38] sm:$0xff]
    %v54 = vld [vmem:[#allocation5 + $0x40] sm:$0xff]
    %v55 = vld [vmem:[#allocation5 + $0x48] sm:$0xff]
    %v56 = vld [vmem:[#allocation5 + $0x50] sm:$0xff]
    %v57 = vld [vmem:[#allocation5 + $0x58] sm:$0xff]
    %v58 = vld [vmem:[#allocation5 + $0x60] sm:$0xff]
    %v59 = vld [vmem:[#allocation5 + $0x68] sm:$0xff]
    %v60 = vld [vmem:[#allocation5 + $0x70] sm:$0xff]
    %v61 = vld [vmem:[#allocation5 + $0x78] sm:$0xff]
    %v62 = vld [vmem:[#allocation5 + $0x80] sm:$0xff]
    %v63 = vld [vmem:[#allocation5 + $0x88] sm:$0xff]
    %v64 = vld [vmem:[#allocation5 + $0x90] sm:$0xff]
    %v65 = vld [vmem:[#allocation5 + $0x98] sm:$0xff]
    %v66 = vld [vmem:[#allocation5 + $0xa0] sm:$0xff]
    %v67 = vld [vmem:[#allocation5 + $0xa8] sm:$0xff]
    %v68 = vld [vmem:[#allocation5 + $0xb0] sm:$0xff]
    %v69 = vld [vmem:[#allocation5 + $0xb8] sm:$0xff]
    %v70 = vld [vmem:[#allocation5 + $0xc0] sm:$0xff]
    %v71 = vld [vmem:[#allocation5 + $0xc8] sm:$0xff]
    %v72 = vld [vmem:[#allocation5 + $0xd0] sm:$0xff]
    %v73 = vld [vmem:[#allocation5 + $0xd8] sm:$0xff]
    %v74 = vld [vmem:[#allocation5 + $0xe0] sm:$0xff]
    %v75 = vld [vmem:[#allocation5 + $0xe8] sm:$0xff]
    %v76 = vld [vmem:[#allocation5 + $0xf0] sm:$0xff]
    %v77 = vld [vmem:[#allocation5 + $0xf8] sm:$0xff]
    %v78 = vld [vmem:[#allocation5 + $0x100] sm:$0xff]
    %v79 = vld [vmem:[#allocation5 + $0x108] sm:$0xff]
    %v80 = vld [vmem:[#allocation5 + $0x110] sm:$0xff]
    %v81 = vld [vmem:[#allocation5 + $0x118] sm:$0xff]
    %v82 = vld [vmem:[#allocation5 + $0x120] sm:$0xff]
    %v83 = vld [vmem:[#allocation5 + $0x128] sm:$0xff]
    %v84 = vld [vmem:[#allocation5 + $0x130] sm:$0xff]
    %v85 = vld [vmem:[#allocation5 + $0x138] sm:$0xff]
    %v86 = vld [vmem:[#allocation5 + $0x140] sm:$0xff]
    %v87 = vld [vmem:[#allocation5 + $0x148] sm:$0xff]
    %v88 = vld [vmem:[#allocation5 + $0x150] sm:$0xff]
    %v89 = vld [vmem:[#allocation5 + $0x158] sm:$0xff]
    %v90 = vld [vmem:[#allocation5 + $0x160] sm:$0xff]
    %v91 = vld [vmem:[#allocation5 + $0x168] sm:$0xff]
    %v92 = vld [vmem:[#allocation5 + $0x170] sm:$0xff]
    %v93 = vld [vmem:[#allocation5 + $0x178] sm:$0xff]
    %v94 = vld [vmem:[#allocation5 + $0x180] sm:$0xff]
    %v95 = vld [vmem:[#allocation5 + $0x188] sm:$0xff]
    %v96 = vld [vmem:[#allocation5 + $0x190] sm:$0xff]
    %v97 = vld [vmem:[#allocation5 + $0x198] sm:$0xff]
    %v98 = vld [vmem:[#allocation5 + $0x1a0] sm:$0xff]
    %v99 = vld [vmem:[#allocation5 + $0x1a8] sm:$0xff]
    %v100 = vld [vmem:[#allocation5 + $0x1b0] sm:$0xff]
    %v101 = vld [vmem:[#allocation5 + $0x1b8] sm:$0xff]
    %v102 = vld [vmem:[#allocation5 + $0x1c0] sm:$0xff]
    %v103 = vld [vmem:[#allocation5 + $0x1c8] sm:$0xff]
    %v104 = vld [vmem:[#allocation5 + $0x1d0] sm:$0xff]
    %v105 = vld [vmem:[#allocation5 + $0x1d8] sm:$0xff]
    %v106 = vld [vmem:[#allocation5 + $0x1e0] sm:$0xff]
    %v107 = vld [vmem:[#allocation5 + $0x1e8] sm:$0xff]
    %v108 = vld [vmem:[#allocation5 + $0x1f0] sm:$0xff]
    %v109 = vld [vmem:[#allocation5 + $0x1f8] sm:$0xff]
    %v174 = vunpack.c.l.b16 %v46
    %v175 = vunpack.c.h.b16 %v46
    %v176 = vunpack.c.l.b16 %v47
    %v177 = vunpack.c.h.b16 %v47
    %v178 = vunpack.c.l.b16 %v48
    %v179 = vunpack.c.h.b16 %v48
    %v180 = vunpack.c.l.b16 %v49
    %v181 = vunpack.c.h.b16 %v49
    %v182 = vunpack.c.l.b16 %v50
    %v183 = vunpack.c.h.b16 %v50
    %v184 = vunpack.c.l.b16 %v51
    %v185 = vunpack.c.h.b16 %v51
    %v186 = vunpack.c.l.b16 %v52
    %v187 = vunpack.c.h.b16 %v52
    %v188 = vunpack.c.l.b16 %v53
    %v189 = vunpack.c.h.b16 %v53
    %v190 = vunpack.c.l.b16 %v54
    %v191 = vunpack.c.h.b16 %v54
    %v192 = vunpack.c.l.b16 %v55
    %v193 = vunpack.c.h.b16 %v55
    %v194 = vunpack.c.l.b16 %v56
    %v195 = vunpack.c.h.b16 %v56
    %v196 = vunpack.c.l.b16 %v57
    %v197 = vunpack.c.h.b16 %v57
    %v198 = vunpack.c.l.b16 %v58
    %v199 = vunpack.c.h.b16 %v58
    %v200 = vunpack.c.l.b16 %v59
    %v201 = vunpack.c.h.b16 %v59
    %v202 = vunpack.c.l.b16 %v60
    %v203 = vunpack.c.h.b16 %v60
    %v204 = vunpack.c.l.b16 %v61
    %v205 = vunpack.c.h.b16 %v61
    %v206 = vunpack.c.l.b16 %v62
    %v207 = vunpack.c.h.b16 %v62
    %v208 = vunpack.c.l.b16 %v63
    %v209 = vunpack.c.h.b16 %v63
    %v210 = vunpack.c.l.b16 %v64
    %v211 = vunpack.c.h.b16 %v64
    %v212 = vunpack.c.l.b16 %v65
    %v213 = vunpack.c.h.b16 %v65
    %v214 = vunpack.c.l.b16 %v66
    %v215 = vunpack.c.h.b16 %v66
    %v216 = vunpack.c.l.b16 %v67
    %v217 = vunpack.c.h.b16 %v67
    %v218 = vunpack.c.l.b16 %v68
    %v219 = vunpack.c.h.b16 %v68
    %v220 = vunpack.c.l.b16 %v69
    %v221 = vunpack.c.h.b16 %v69
    %v222 = vunpack.c.l.b16 %v70
    %v223 = vunpack.c.h.b16 %v70
    %v224 = vunpack.c.l.b16 %v71
    %v225 = vunpack.c.h.b16 %v71
    %v226 = vunpack.c.l.b16 %v72
    %v227 = vunpack.c.h.b16 %v72
    %v228 = vunpack.c.l.b16 %v73
    %v229 = vunpack.c.h.b16 %v73
    %v230 = vunpack.c.l.b16 %v74
    %v231 = vunpack.c.h.b16 %v74
    %v232 = vunpack.c.l.b16 %v75
    %v233 = vunpack.c.h.b16 %v75
    %v234 = vunpack.c.l.b16 %v76
    %v235 = vunpack.c.h.b16 %v76
    %v236 = vunpack.c.l.b16 %v77
    %v237 = vunpack.c.h.b16 %v77
    %v238 = vunpack.c.l.b16 %v78
    %v239 = vunpack.c.h.b16 %v78
    %v240 = vunpack.c.l.b16 %v79
    %v241 = vunpack.c.h.b16 %v79
    %v242 = vunpack.c.l.b16 %v80
    %v243 = vunpack.c.h.b16 %v80
    %v244 = vunpack.c.l.b16 %v81
    %v245 = vunpack.c.h.b16 %v81
    %v246 = vunpack.c.l.b16 %v82
    %v247 = vunpack.c.h.b16 %v82
    %v248 = vunpack.c.l.b16 %v83
    %v249 = vunpack.c.h.b16 %v83
    %v250 = vunpack.c.l.b16 %v84
    %v251 = vunpack.c.h.b16 %v84
    %v252 = vunpack.c.l.b16 %v85
    %v253 = vunpack.c.h.b16 %v85
    %v254 = vunpack.c.l.b16 %v86
    %v255 = vunpack.c.h.b16 %v86
    %v256 = vunpack.c.l.b16 %v87
    %v257 = vunpack.c.h.b16 %v87
    %v258 = vunpack.c.l.b16 %v88
    %v259 = vunpack.c.h.b16 %v88
    %v260 = vunpack.c.l.b16 %v89
    %v261 = vunpack.c.h.b16 %v89
    %v262 = vunpack.c.l.b16 %v90
    %v263 = vunpack.c.h.b16 %v90
    %v264 = vunpack.c.l.b16 %v91
    %v265 = vunpack.c.h.b16 %v91
    %v266 = vunpack.c.l.b16 %v92
    %v267 = vunpack.c.h.b16 %v92
    %v268 = vunpack.c.l.b16 %v93
    %v269 = vunpack.c.h.b16 %v93
    %v270 = vunpack.c.l.b16 %v94
    %v271 = vunpack.c.h.b16 %v94
    %v272 = vunpack.c.l.b16 %v95
    %v273 = vunpack.c.h.b16 %v95
    %v274 = vunpack.c.l.b16 %v96
    %v275 = vunpack.c.h.b16 %v96
    %v276 = vunpack.c.l.b16 %v97
    %v277 = vunpack.c.h.b16 %v97
    %v278 = vunpack.c.l.b16 %v98
    %v279 = vunpack.c.h.b16 %v98
    %v280 = vunpack.c.l.b16 %v99
    %v281 = vunpack.c.h.b16 %v99
    %v282 = vunpack.c.l.b16 %v100
    %v283 = vunpack.c.h.b16 %v100
    %v284 = vunpack.c.l.b16 %v101
    %v285 = vunpack.c.h.b16 %v101
    %v286 = vunpack.c.l.b16 %v102
    %v287 = vunpack.c.h.b16 %v102
    %v288 = vunpack.c.l.b16 %v103
    %v289 = vunpack.c.h.b16 %v103
    %v290 = vunpack.c.l.b16 %v104
    %v291 = vunpack.c.h.b16 %v104
    %v292 = vunpack.c.l.b16 %v105
    %v293 = vunpack.c.h.b16 %v105
    %v294 = vunpack.c.l.b16 %v106
    %v295 = vunpack.c.h.b16 %v106
    %v296 = vunpack.c.l.b16 %v107
    %v297 = vunpack.c.h.b16 %v107
    %v298 = vunpack.c.l.b16 %v108
    %v299 = vunpack.c.h.b16 %v108
    %v300 = vunpack.c.l.b16 %v109
    %v301 = vunpack.c.h.b16 %v109
    %v302 = vpack.c.b16 %v178, %v174
    %v303 = vpack.c.b16 %v179, %v175
    %v304 = vpack.c.b16 %v180, %v176
    %v305 = vpack.c.b16 %v181, %v177
    %v306 = vpack.c.b16 %v186, %v182
    %v307 = vpack.c.b16 %v187, %v183
    %v308 = vpack.c.b16 %v188, %v184
    %v309 = vpack.c.b16 %v189, %v185
    %v310 = vpack.c.b16 %v194, %v190
    %v311 = vpack.c.b16 %v195, %v191
    %v312 = vpack.c.b16 %v196, %v192
    %v313 = vpack.c.b16 %v197, %v193
    %v314 = vpack.c.b16 %v202, %v198
    %v315 = vpack.c.b16 %v203, %v199
    %v316 = vpack.c.b16 %v204, %v200
    %v317 = vpack.c.b16 %v205, %v201
    %v318 = vpack.c.b16 %v210, %v206
    %v319 = vpack.c.b16 %v211, %v207
    %v320 = vpack.c.b16 %v212, %v208
    %v321 = vpack.c.b16 %v213, %v209
    %v322 = vpack.c.b16 %v218, %v214
    %v323 = vpack.c.b16 %v219, %v215
    %v324 = vpack.c.b16 %v220, %v216
    %v325 = vpack.c.b16 %v221, %v217
    %v326 = vpack.c.b16 %v226, %v222
    %v327 = vpack.c.b16 %v227, %v223
    %v328 = vpack.c.b16 %v228, %v224
    %v329 = vpack.c.b16 %v229, %v225
    %v330 = vpack.c.b16 %v234, %v230
    %v331 = vpack.c.b16 %v235, %v231
    %v332 = vpack.c.b16 %v236, %v232
    %v333 = vpack.c.b16 %v237, %v233
    %v334 = vpack.c.b16 %v242, %v238
    %v335 = vpack.c.b16 %v243, %v239
    %v336 = vpack.c.b16 %v244, %v240
    %v337 = vpack.c.b16 %v245, %v241
    %v338 = vpack.c.b16 %v250, %v246
    %v339 = vpack.c.b16 %v251, %v247
    %v340 = vpack.c.b16 %v252, %v248
    %v341 = vpack.c.b16 %v253, %v249
    %v342 = vpack.c.b16 %v258, %v254
    %v343 = vpack.c.b16 %v259, %v255
    %v344 = vpack.c.b16 %v260, %v256
    %v345 = vpack.c.b16 %v261, %v257
    %v346 = vpack.c.b16 %v266, %v262
    %v347 = vpack.c.b16 %v267, %v263
    %v348 = vpack.c.b16 %v268, %v264
    %v349 = vpack.c.b16 %v269, %v265
    %v350 = vpack.c.b16 %v274, %v270
    %v351 = vpack.c.b16 %v275, %v271
    %v352 = vpack.c.b16 %v276, %v272
    %v353 = vpack.c.b16 %v277, %v273
    %v354 = vpack.c.b16 %v282, %v278
    %v355 = vpack.c.b16 %v283, %v279
    %v356 = vpack.c.b16 %v284, %v280
    %v357 = vpack.c.b16 %v285, %v281
    %v358 = vpack.c.b16 %v290, %v286
    %v359 = vpack.c.b16 %v291, %v287
    %v360 = vpack.c.b16 %v292, %v288
    %v361 = vpack.c.b16 %v293, %v289
    %v362 = vpack.c.b16 %v298, %v294
    %v363 = vpack.c.b16 %v299, %v295
    %v364 = vpack.c.b16 %v300, %v296
    %v365 = vpack.c.b16 %v301, %v297
    %430 = vmatprep.subr.bf16.mxu0 %v331
    %431 = vmatpush1.bf16.msra.mxu0 %v330
    %432 = vmatprep.subr.bf16.mxu0 %v327
    %433 = vmatpush1.bf16.msra.mxu0 %v326
    %434 = vmatprep.subr.bf16.mxu0 %v323
    %435 = vmatpush1.bf16.msra.mxu0 %v322
    %436 = vmatprep.subr.bf16.mxu0 %v319
    %437 = vmatpush1.bf16.msra.mxu0 %v318
    %438 = vmatprep.subr.bf16.mxu0 %v315
    %439 = vmatpush1.bf16.msra.mxu0 %v314
    %440 = vmatprep.subr.bf16.mxu0 %v311
    %441 = vmatpush1.bf16.msra.mxu0 %v310
    %442 = vmatprep.subr.bf16.mxu0 %v307
    %443 = vmatpush1.bf16.msra.mxu0 %v306
    %444 = vmatprep.subr.bf16.mxu0 %v303
    %445 = vmatpush1.bf16.msra.mxu0 %v302
    %446 = vmatprep.subr.bf16.mxu0 %v363
    %447 = vmatpush2.bf16.msra.mxu0 %v362
    %448 = vmatprep.subr.bf16.mxu0 %v359
    %449 = vmatpush2.bf16.msra.mxu0 %v358
    %450 = vmatprep.subr.bf16.mxu0 %v355
    %451 = vmatpush2.bf16.msra.mxu0 %v354
    %452 = vmatprep.subr.bf16.mxu0 %v351
    %453 = vmatpush2.bf16.msra.mxu0 %v350
    %454 = vmatprep.subr.bf16.mxu0 %v347
    %455 = vmatpush2.bf16.msra.mxu0 %v346
    %456 = vmatprep.subr.bf16.mxu0 %v343
    %457 = vmatpush2.bf16.msra.mxu0 %v342
    %458 = vmatprep.subr.bf16.mxu0 %v339
    %459 = vmatpush2.bf16.msra.mxu0 %v338
    %460 = vmatprep.subr.bf16.mxu0 %v335
    %461 = vmatpush2.bf16.msra.mxu0 %v334
    %462 = vmatprep.mubr.bf16.mxu0 %v45
    %463 = vmatmul.mubr.bf16.gmra.mxu0 %v44
    %v464 = vpop.f32.mrf.mxu0
    %v465 = vadd.f32 0.0, %v464
    %v466 = vpop.f32.mrf.mxu0
    %v467 = vadd.f32 0.0, %v466
    %v468 = vpop.f32.mrf.mxu0
    %v469 = vadd.f32 0.0, %v468
    %v470 = vpop.f32.mrf.mxu0
    %v471 = vadd.f32 0.0, %v470
    %472 = vdwg.mxu0
    %473 = vmatprep.subr.bf16.mxu0 %v333
    %474 = vmatpush1.bf16.msra.mxu0 %v332
    %475 = vmatprep.subr.bf16.mxu0 %v329
    %476 = vmatpush1.bf16.msra.mxu0 %v328
    %477 = vmatprep.subr.bf16.mxu0 %v325
    %478 = vmatpush1.bf16.msra.mxu0 %v324
    %479 = vmatprep.subr.bf16.mxu0 %v321
    %480 = vmatpush1.bf16.msra.mxu0 %v320
    %481 = vmatprep.subr.bf16.mxu0 %v317
    %482 = vmatpush1.bf16.msra.mxu0 %v316
    %483 = vmatprep.subr.bf16.mxu0 %v313
    %484 = vmatpush1.bf16.msra.mxu0 %v312
    %485 = vmatprep.subr.bf16.mxu0 %v309
    %486 = vmatpush1.bf16.msra.mxu0 %v308
    %487 = vmatprep.subr.bf16.mxu0 %v305
    %488 = vmatpush1.bf16.msra.mxu0 %v304
    %489 = vmatprep.subr.bf16.mxu0 %v365
    %490 = vmatpush2.bf16.msra.mxu0 %v364
    %491 = vmatprep.subr.bf16.mxu0 %v361
    %492 = vmatpush2.bf16.msra.mxu0 %v360
    %493 = vmatprep.subr.bf16.mxu0 %v357
    %494 = vmatpush2.bf16.msra.mxu0 %v356
    %495 = vmatprep.subr.bf16.mxu0 %v353
    %496 = vmatpush2.bf16.msra.mxu0 %v352
    %497 = vmatprep.subr.bf16.mxu0 %v349
    %498 = vmatpush2.bf16.msra.mxu0 %v348
    %499 = vmatprep.subr.bf16.mxu0 %v345
    %500 = vmatpush2.bf16.msra.mxu0 %v344
    %501 = vmatprep.subr.bf16.mxu0 %v341
    %502 = vmatpush2.bf16.msra.mxu0 %v340
    %503 = vmatprep.subr.bf16.mxu0 %v337
    %504 = vmatpush2.bf16.msra.mxu0 %v336
    %505 = vmatprep.mubr.bf16.mxu0 %v45
    %506 = vmatmul.mubr.bf16.gmra.mxu0 %v44
    %v507 = vpop.f32.mrf.mxu0
    %v508 = vadd.f32 0.0, %v507
    %v509 = vpop.f32.mrf.mxu0
    %v510 = vadd.f32 0.0, %v509
    %v511 = vpop.f32.mrf.mxu0
    %v512 = vadd.f32 0.0, %v511
    %v513 = vpop.f32.mrf.mxu0
    %v514 = vadd.f32 0.0, %v513
    %515 = vdwg.mxu0
    %516 = vst [vmem:[#allocation7] sm:$0xff] %v465
    %517 = vst [vmem:[#allocation7 + $0x8] sm:$0xff] %v467
    %518 = vst [vmem:[#allocation7 + $0x10] sm:$0xff] %v508
    %519 = vst [vmem:[#allocation7 + $0x18] sm:$0xff] %v510
    %520 = vst [vmem:[#allocation7 + $0x20] sm:$0xff] %v469
    %521 = vst [vmem:[#allocation7 + $0x28] sm:$0xff] %v471
    %522 = vst [vmem:[#allocation7 + $0x30] sm:$0xff] %v512
    %523 = vst [vmem:[#allocation7 + $0x38] sm:$0xff] %v514
    // Predicated region
    $region18: #{tpu_custom_call.1} parent=1 // pred_check
      _
    $region19: #{tpu_custom_call.1} parent=1 // pred_check_branch
      %525 = sbr.rel (0) target = $region21
    $region20: #{tpu_custom_call.1} parent=1 // pred_region
      %s527 = ssub.s32 1024, 1024
      %528 = vsyncadd [#allocation4], %s527
      %s529 = sshll.u32 [#allocation7], 4
      %s530 = int_to_ptr.vmem [resolvable:$true] %s529
      %535 = dma.vmem_to_hbm [thread:$0]  %s530, 1024, %s2, [#allocation4], 512, 512, 32
    $region21: #{tpu_custom_call.1} parent=1 // pred_fallthru
      _
    // Predicated region
    $region22: #{tpu_custom_call.1} parent=1 // pred_check
      _
    $region23: #{tpu_custom_call.1} parent=1 // pred_check_branch
      %537 = sbr.rel (0) target = $region25
    $region24: #{tpu_custom_call.1} parent=1 // pred_region
      %538 = dma.done [#allocation4], 1024
    $region25: #{tpu_custom_call.1} parent=1 // pred_fallthru
      _
    %539 = vsyncpa [#allocation3], 1
    %540 = vsyncpa [#allocation6], 1
    %541 = vsyncpa [#allocation4], 1

</llo_original>
